<compile_context>
chip_gen: v5e
topology: v5e:2x2
jax: 0.10.0
libtpu: 0.0.40
codegen_flags: <defaults>
</compile_context>

<pallas_src>
import functools

import jax
import jax.numpy as jnp
from jax import lax
from jax.experimental import pallas as pl
from jax.experimental.pallas import tpu as pltpu


def xtoy_kernel(x_ref, wt_ref, b_ref, o_ref, *, chunk):
    tb, n, dx = x_ref.shape
    num_chunks = n // chunk
    n_full = num_chunks * chunk
    tail = n - n_full

    inv_n = jnp.float32(1.0 / n)
    # torch.std is unbiased (ddof=1); n == 1 -> NaN, matching torch.
    inv_nm1 = jnp.float32(1.0 / (n - 1)) if n > 1 else jnp.float32(jnp.nan)

    def load(start, size):
        return x_ref[:, pl.ds(start, size), :].astype(jnp.float32)

    # ---- pass 1: fused sum / min / max (one VMEM read of the tile) --------
    def accum1(xc, carry):
        s, mi, ma = carry
        return (s + jnp.sum(xc, axis=1),
                jnp.minimum(mi, jnp.min(xc, axis=1)),
                jnp.maximum(ma, jnp.max(xc, axis=1)))

    carry = (jnp.zeros((tb, dx), jnp.float32),
             jnp.full((tb, dx), jnp.inf, jnp.float32),
             jnp.full((tb, dx), -jnp.inf, jnp.float32))
    if num_chunks == 1:
        carry = accum1(load(0, chunk), carry)            # static slice
    else:
        def body1(c, carry):
            return accum1(load(pl.multiple_of(c * chunk, chunk), chunk), carry)
        carry = lax.fori_loop(0, num_chunks, body1, carry, unroll=True)
    if tail > 0:
        carry = accum1(load(n_full, tail), carry)        # static tail slice
    s, mi, ma = carry

    mean = s * inv_n
    mean_b = mean[:, None, :]   # hoisted: no per-iteration broadcast_in_dim

    # ---- pass 2: centered sum of squares (accurate unbiased std) ----------
    def accum2(xc, ssq):
        d = xc - mean_b
        return ssq + jnp.sum(d * d, axis=1)

    ssq = jnp.zeros((tb, dx), jnp.float32)
    if num_chunks == 1:
        ssq = accum2(load(0, chunk), ssq)
    else:
        def body2(c, ssq):
            return accum2(load(pl.multiple_of(c * chunk, chunk), chunk), ssq)
        ssq = lax.fori_loop(0, num_chunks, body2, ssq, unroll=True)
    if tail > 0:
        ssq = accum2(load(n_full, tail), ssq)

    std = jnp.sqrt(ssq * inv_nm1)

    # z = hstack((mean, min, max, std)) -> one full-depth MXU matmul.
    z = jnp.concatenate([mean, mi, ma, std], axis=-1)    # (tb, 4*dx)
    out = jnp.dot(z, wt_ref[...], preferred_element_type=jnp.float32)
    out = out + b_ref[...]
    o_ref[...] = out.astype(o_ref.dtype)


def _round_up(x, m):
    return ((x + m - 1) // m) * m


def _round_down(x, m):
    return (x // m) * m


@functools.lru_cache(maxsize=1)
def _vmem_capacity_bytes():
    try:
        info = pltpu.get_tpu_info()
        cap = int(getattr(info, "vmem_capacity_bytes", 0))
        if cap > 0:
            return cap
    except Exception:
        pass
    return 64 * 1024 * 1024   # conservative fallback: v7x per-TensorCore VMEM


@functools.partial(jax.jit, static_argnames=("block_bs",))
def xtoy_forward(x, weight, bias, *, block_bs=None):
    """x: (bs, n, dx); weight: (dy, 4*dx); bias: (dy,) -> (bs, dy) f32."""
    bs, n, dx = x.shape
    dy = weight.shape[0]

    # Lane-dense output: pad dy to a multiple of 128 (zero-padded weight/bias
    # columns; extra output columns sliced off below).
    # TODO(synk): hoist this tiny pad+transpose out of the per-call path when
    # the weights are static across calls.
    dy_pad = _round_up(max(dy, 1), 128)
    wt = jnp.zeros((4 * dx, dy_pad), jnp.float32)
    wt = wt.at[:, :dy].set(weight.T.astype(jnp.float32))
    b2 = jnp.zeros((1, dy_pad), jnp.float32)
    b2 = b2.at[:, :dy].set(bias.astype(jnp.float32))

    # Per-generation budgets: v5e/v6e have 128 MiB physical VMEM -> bigger
    # blocks / limit; v7x (or unknown) -> capped.
    vmem_cap = _vmem_capacity_bytes()
    big_vmem = vmem_cap >= 100 * 1024 * 1024
    block_cap_bytes = (20 if big_vmem else 10) * 1024 * 1024
    vmem_limit = (96 if big_vmem else 48) * 1024 * 1024

    # Batch tile sized from the *padded* (sublane, lane)-tiled footprint.
    itemsize = jnp.dtype(x.dtype).itemsize
    sublane = max(8, 32 // itemsize)                    # f32: 8, bf16: 16, int8: 32
    padded_row_bytes = _round_up(n, sublane) * _round_up(dx, 128) * itemsize

    if block_bs is None:
        tb = block_cap_bytes // max(1, padded_row_bytes)
        tb = max(8, min(1024, _round_down(tb, 8)))
        tb = min(tb, _round_up(bs, 8))
        # v7x megacore: ensure >= 2 grid steps so the second TensorCore gets
        # work (harmless on single-TC v5e/v6e).
        if bs >= 16 and tb >= bs:
            tb = max(8, _round_down(bs // 2, 8))
    else:
        tb = block_bs

    grid = (pl.cdiv(bs, tb),)   # last block may be partial; out-of-range output
                                # rows are masked on store / never returned.

    # Node-axis chunk for the in-kernel fused reduction loops (<= ~16 chunks,
    # sublane-aligned whenever n >= 8).
    chunk = min(n, _round_up(max(1, -(-n // 16)), 8))

    out = pl.pallas_call(
        functools.partial(xtoy_kernel, chunk=chunk),
        out_shape=jax.ShapeDtypeStruct((bs, dy_pad), jnp.float32),
        grid=grid,
        in_specs=[
            # Native-dtype input: no wrapper-side upcast -> no extra HBM copy.
            pl.BlockSpec((tb, n, dx), lambda i: (i, 0, 0)),
            pl.BlockSpec((4 * dx, dy_pad), lambda i: (0, 0)),   # VMEM-resident
            pl.BlockSpec((1, dy_pad), lambda i: (0, 0)),        # VMEM-resident
        ],
        out_specs=pl.BlockSpec((tb, dy_pad), lambda i: (i, 0)),
        compiler_params=pltpu.CompilerParams(
            dimension_semantics=("parallel",),
            vmem_limit_bytes=vmem_limit,
        ),
    )(x, wt, b2)

    return out[:, :dy]


def reference_forward(x, weight, bias):
    """Pure-JAX reference matching the PyTorch module."""
    m = jnp.mean(x, axis=1)
    mi = jnp.min(x, axis=1)
    ma = jnp.max(x, axis=1)
    std = jnp.std(x, axis=1, ddof=1)              # torch.std is unbiased
    z = jnp.concatenate([m, mi, ma, std], axis=-1)
    return z @ weight.T + bias


if __name__ == "__main__":
    key = jax.random.PRNGKey(0)
    kx, kw, kb, kx2, kx3 = jax.random.split(key, 5)

    # Shapes consistent with the module's forward: X is (bs, n, dx).
    bs, n, dx, dy = 2, 8, 32, 16

    x = jax.random.normal(kx, (bs, n, dx), dtype=jnp.float32)

    # Deterministic nn.Linear(4*dx, dy)-style init.
    fan_in = 4 * dx
    bound = 1.0 / jnp.sqrt(jnp.float32(fan_in))
    weight = jax.random.uniform(kw, (dy, 4 * dx), dtype=jnp.float32,
                                minval=-bound, maxval=bound)
    bias = jax.random.uniform(kb, (dy,), dtype=jnp.float32,
                              minval=-bound, maxval=bound)

    out = jax.block_until_ready(xtoy_forward(x, weight, bias))
    ref = reference_forward(x, weight, bias)
    assert out.shape == (bs, dy), out.shape
    assert jnp.allclose(out, ref, atol=1e-4, rtol=1e-5), \
        float(jnp.max(jnp.abs(out - ref)))

    # Larger batch, auto tile selection: exercises the multi-block grid and the
    # >=2-grid-step (megacore) path.
    bs2, n2 = 24, 16
    x2 = jax.random.normal(kx2, (bs2, n2, dx), dtype=jnp.float32)
    out2 = jax.block_until_ready(xtoy_forward(x2, weight, bias))
    ref2 = reference_forward(x2, weight, bias)
    assert out2.shape == (bs2, dy), out2.shape
    assert jnp.allclose(out2, ref2, atol=1e-4, rtol=1e-5), \
        float(jnp.max(jnp.abs(out2 - ref2)))

    # Ragged case: bs not a multiple of the tile and n not a multiple of the
    # sublane chunk -> exercises the partial last block + tail-slice paths.
    bs3, n3 = 10, 13
    x3 = jax.random.normal(kx3, (bs3, n3, dx), dtype=jnp.float32)
    out3 = jax.block_until_ready(xtoy_forward(x3, weight, bias, block_bs=8))
    ref3 = reference_forward(x3, weight, bias)
    assert out3.shape == (bs3, dy), out3.shape
    assert jnp.allclose(out3, ref3, atol=1e-4, rtol=1e-5), \
        float(jnp.max(jnp.abs(out3 - ref3)))

    print("KERNEL_OK")
</pallas_src>

<mosaic_0001>
module attributes {stable_mosaic.version = 11 : i64} {
  func.func @xtoy_kernel(%arg0: i32, %arg1: memref<8x8x32xf32, #tpu.memory_space<vmem>>, %arg2: memref<128x128xf32, #tpu.memory_space<vmem>>, %arg3: memref<1x128xf32, #tpu.memory_space<vmem>>, %arg4: memref<8x128xf32, #tpu.memory_space<vmem>>) attributes {dimension_semantics = [#tpu.dimension_semantics<parallel>], iteration_bounds = array<i64: 1>, scalar_prefetch = 0 : i64, scratch_operands = 0 : i64, tpu.core_type = #tpu.core_type<tc>, window_params = [{transform_indices = @transform_0, window_bounds = array<i64: 8, 8, 32>}, {pipeline_mode = #tpu.pipeline_mode<synchronous>, transform_indices = @transform_1, window_bounds = array<i64: 128, 128>}, {pipeline_mode = #tpu.pipeline_mode<synchronous>, transform_indices = @transform_2, window_bounds = array<i64: 1, 128>}, {transform_indices = @transform_3, window_bounds = array<i64: 8, 128>}]} {
    %cst = arith.constant 0.000000e+00 : f32
    %0 = vector.broadcast %cst : f32 to vector<8x32xf32>
    %cst_0 = arith.constant 0x7F800000 : f32
    %1 = vector.broadcast %cst_0 : f32 to vector<8x32xf32>
    %cst_1 = arith.constant 0xFF800000 : f32
    %2 = vector.broadcast %cst_1 : f32 to vector<8x32xf32>
    %c0 = arith.constant 0 : index
    %c0_2 = arith.constant 0 : index
    %c0_3 = arith.constant 0 : index
    %3 = vector.load %arg1[%c0, %c0_2, %c0_3] : memref<8x8x32xf32, #tpu.memory_space<vmem>>, vector<8x8x32xf32>
    %cst_4 = arith.constant dense<0.000000e+00> : vector<8x32xf32>
    %4 = vector.multi_reduction <add>, %3, %cst_4 [1] : vector<8x8x32xf32> to vector<8x32xf32>
    %5 = arith.addf %0, %4 : vector<8x32xf32>
    %cst_5 = arith.constant dense<0x7F800000> : vector<8x32xf32>
    %6 = vector.multi_reduction <minimumf>, %3, %cst_5 [1] : vector<8x8x32xf32> to vector<8x32xf32>
    %7 = arith.minimumf %1, %6 : vector<8x32xf32>
    %cst_6 = arith.constant dense<0xFF800000> : vector<8x32xf32>
    %8 = vector.multi_reduction <maximumf>, %3, %cst_6 [1] : vector<8x8x32xf32> to vector<8x32xf32>
    %9 = arith.maximumf %2, %8 : vector<8x32xf32>
    %cst_7 = arith.constant 1.250000e-01 : f32
    %10 = vector.broadcast %cst_7 : f32 to vector<8x32xf32>
    %11 = arith.mulf %5, %10 : vector<8x32xf32>
    %12 = vector.shape_cast %11 : vector<8x32xf32> to vector<8x1x32xf32>
    %cst_8 = arith.constant 0.000000e+00 : f32
    %13 = vector.broadcast %cst_8 : f32 to vector<8x32xf32>
    %c0_9 = arith.constant 0 : index
    %c0_10 = arith.constant 0 : index
    %c0_11 = arith.constant 0 : index
    %14 = vector.load %arg1[%c0_9, %c0_10, %c0_11] : memref<8x8x32xf32, #tpu.memory_space<vmem>>, vector<8x8x32xf32>
    %15 = vector.broadcast %12 : vector<8x1x32xf32> to vector<8x8x32xf32>
    %16 = arith.subf %14, %15 : vector<8x8x32xf32>
    %17 = arith.mulf %16, %16 : vector<8x8x32xf32>
    %cst_12 = arith.constant dense<0.000000e+00> : vector<8x32xf32>
    %18 = vector.multi_reduction <add>, %17, %cst_12 [1] : vector<8x8x32xf32> to vector<8x32xf32>
    %19 = arith.addf %13, %18 : vector<8x32xf32>
    %cst_13 = arith.constant 0.142857149 : f32
    %20 = vector.broadcast %cst_13 : f32 to vector<8x32xf32>
    %21 = arith.mulf %19, %20 : vector<8x32xf32>
    %22 = math.sqrt %21 : vector<8x32xf32>
    %23 = tpu.concatenate %11, %7, %9, %22 in 1 : vector<8x32xf32>, vector<8x32xf32>, vector<8x32xf32>, vector<8x32xf32> -> vector<8x128xf32>
    %c0_14 = arith.constant 0 : index
    %c0_15 = arith.constant 0 : index
    %24 = vector.load %arg2[%c0_14, %c0_15] : memref<128x128xf32, #tpu.memory_space<vmem>>, vector<128x128xf32>
    %cst_16 = arith.constant dense<0.000000e+00> : vector<8x128xf32>
    %25 = tpu.matmul %23, %24, %cst_16 {dimension_numbers = #tpu.dot_dimension_numbers<[1], [0], [0], [1], [0, 0, 1, 1], [], []>} : vector<8x128xf32>, vector<128x128xf32>, vector<8x128xf32> -> vector<8x128xf32>
    %c0_17 = arith.constant 0 : index
    %c0_18 = arith.constant 0 : index
    %26 = vector.load %arg3[%c0_17, %c0_18] : memref<1x128xf32, #tpu.memory_space<vmem>>, vector<1x128xf32>
    %27 = vector.broadcast %26 : vector<1x128xf32> to vector<8x128xf32>
    %28 = arith.addf %25, %27 : vector<8x128xf32>
    %c0_19 = arith.constant 0 : index
    %c0_20 = arith.constant 0 : index
    %29 = vector.load %arg4[%c0_19, %c0_20] : memref<8x128xf32, #tpu.memory_space<vmem>>, vector<8x128xf32>
    tpu.vector_store %arg4[%c0_19, %c0_20], %28 {strides = array<i32>} : memref<8x128xf32, #tpu.memory_space<vmem>>, vector<8x128xf32>,
    return
  }
  func.func @transform_0(%arg0: i32) -> (i32, i32, i32) {
    %c0_i32 = arith.constant 0 : i32
    %c0_i32_0 = arith.constant 0 : i32
    %c0_i32_1 = arith.constant 0 : i32
    return %arg0, %c0_i32, %c0_i32_0 : i32, i32, i32
  }
  func.func @transform_1(%arg0: i32) -> (i32, i32) {
    %c0_i32 = arith.constant 0 : i32
    %c0_i32_0 = arith.constant 0 : i32
    %c0_i32_1 = arith.constant 0 : i32
    return %c0_i32, %c0_i32_0 : i32, i32
  }
  func.func @transform_2(%arg0: i32) -> (i32, i32) {
    %c0_i32 = arith.constant 0 : i32
    %c0_i32_0 = arith.constant 0 : i32
    %c0_i32_1 = arith.constant 0 : i32
    return %c0_i32, %c0_i32_0 : i32, i32
  }
  func.func @transform_3(%arg0: i32) -> (i32, i32) {
    %c0_i32 = arith.constant 0 : i32
    %c0_i32_0 = arith.constant 0 : i32
    return %arg0, %c0_i32 : i32, i32
  }
}

</mosaic_0001>

<llo_original>
// kernel: xtoy_forward.1
$region0: #{xtoy_forward.1}
  #allocation0 [shape = 'u32[]', space=smem, size = 0x4, offset = 0x4, fixed_abs, tag = 'smem constant byte address 0x4 - core index']
  #allocation1 [shape = 'u32[72,128]{1,0:T(1,128)}', space=vmem, size = 0x9000, scoped, tag = 'internal scratch']
  %s0 = inlined_call_operand.vmem [shape: f32[2,8,32], index: 0, kind: input, shape index: {}]
  %s1 = inlined_call_operand.vmem [shape: f32[128,128], index: 1, kind: input, shape index: {}]
  %s2 = inlined_call_operand.vmem [shape: f32[1,128], index: 2, kind: input, shape index: {}]
  %s3 = inlined_call_operand.hbm [shape: f32[2,128], index: 3, kind: output, shape index: {}]
  %s4 = sld [smem:[#allocation0]]
  $region22: #{xtoy_forward.1} parent=0
    _
  %s6 = ssub.s32 1, %s4
  %s7 = scalar_select 0, %s6, %s4
  $region1: #{xtoy_forward.1} parent=0
    #allocation2 [shape = 'u8[4096]{0}', space=vmem, size = 0x1000, scoped, tag = 'output window, operand 0, single buffered']
    #allocation3 [shape = 's32[1]{0}', space=sflag, size = 0x4, scoped, tag = 'scoped memory for xtoy_forward.1']
    %8 = vsyncpa [#allocation3], 0
    // Predicated region
    $region2: #{xtoy_forward.1} parent=1 // pred_check
      _
    $region3: #{xtoy_forward.1} parent=1 // pred_check_branch
      %10 = sbr.rel (0) target = $region5
    $region4: #{xtoy_forward.1} parent=1 // pred_region
      _
    $region5: #{xtoy_forward.1} parent=1 // pred_fallthru
      _
    // Predicated region
    $region6: #{xtoy_forward.1} parent=1 // pred_check
      _
    $region7: #{xtoy_forward.1} parent=1 // pred_check_branch
      %12 = sbr.rel (0) target = $region9
    $region8: #{xtoy_forward.1} parent=1 // pred_region
      _
    $region9: #{xtoy_forward.1} parent=1 // pred_fallthru
      _
    // Predicated region
    $region10: #{xtoy_forward.1} parent=1 // pred_check
      _
    $region11: #{xtoy_forward.1} parent=1 // pred_check_branch
      %14 = sbr.rel (0) target = $region13
    $region12: #{xtoy_forward.1} parent=1 // pred_region
      _
    $region13: #{xtoy_forward.1} parent=1 // pred_fallthru
      _
    %v15 = vld [vmem:[%s0] sm:$0xff]
    %v16 = vld [vmem:[%s0 + $0x8] sm:$0xff]
    %v17 = vld [vmem:[%s0 + $0x10] sm:$0xff]
    %v18 = vld [vmem:[%s0 + $0x18] sm:$0xff]
    %v19 = vld [vmem:[%s0 + $0x20] sm:$0xff]
    %v20 = vld [vmem:[%s0 + $0x28] sm:$0xff]
    %v21 = vld [vmem:[%s0 + $0x30] sm:$0xff]
    %v22 = vld [vmem:[%s0 + $0x38] sm:$0xff]
    %vm23 = vcmask 261120
    %v24 = vsel %vm23, %v15, 0.0
    %v25 = vrot.slane %v24, 4
    %v26 = vadd.f32 %v24, %v25
    %v27 = vrot.slane %v26, 2
    %v28 = vadd.f32 %v26, %v27
    %v29 = vrot.slane %v28, 1
    %v30 = vadd.f32 %v28, %v29
    %v31 = vsel %vm23, %v16, 0.0
    %v32 = vrot.slane %v31, 4
    %v33 = vadd.f32 %v31, %v32
    %v34 = vrot.slane %v33, 2
    %v35 = vadd.f32 %v33, %v34
    %v36 = vrot.slane %v35, 1
    %v37 = vadd.f32 %v35, %v36
    %v38 = vsel %vm23, %v17, 0.0
    %v39 = vrot.slane %v38, 4
    %v40 = vadd.f32 %v38, %v39
    %v41 = vrot.slane %v40, 2
    %v42 = vadd.f32 %v40, %v41
    %v43 = vrot.slane %v42, 1
    %v44 = vadd.f32 %v42, %v43
    %v45 = vsel %vm23, %v18, 0.0
    %v46 = vrot.slane %v45, 4
    %v47 = vadd.f32 %v45, %v46
    %v48 = vrot.slane %v47, 2
    %v49 = vadd.f32 %v47, %v48
    %v50 = vrot.slane %v49, 1
    %v51 = vadd.f32 %v49, %v50
    %v52 = vsel %vm23, %v19, 0.0
    %v53 = vrot.slane %v52, 4
    %v54 = vadd.f32 %v52, %v53
    %v55 = vrot.slane %v54, 2
    %v56 = vadd.f32 %v54, %v55
    %v57 = vrot.slane %v56, 1
    %v58 = vadd.f32 %v56, %v57
    %v59 = vsel %vm23, %v20, 0.0
    %v60 = vrot.slane %v59, 4
    %v61 = vadd.f32 %v59, %v60
    %v62 = vrot.slane %v61, 2
    %v63 = vadd.f32 %v61, %v62
    %v64 = vrot.slane %v63, 1
    %v65 = vadd.f32 %v63, %v64
    %v66 = vsel %vm23, %v21, 0.0
    %v67 = vrot.slane %v66, 4
    %v68 = vadd.f32 %v66, %v67
    %v69 = vrot.slane %v68, 2
    %v70 = vadd.f32 %v68, %v69
    %v71 = vrot.slane %v70, 1
    %v72 = vadd.f32 %v70, %v71
    %v73 = vsel %vm23, %v22, 0.0
    %v74 = vrot.slane %v73, 4
    %v75 = vadd.f32 %v73, %v74
    %v76 = vrot.slane %v75, 2
    %v77 = vadd.f32 %v75, %v76
    %v78 = vrot.slane %v77, 1
    %v79 = vadd.f32 %v77, %v78
    %v80 = vadd.f32 %v30, 0.0
    %v81 = vadd.f32 %v37, 0.0
    %v82 = vadd.f32 %v44, 0.0
    %v83 = vadd.f32 %v51, 0.0
    %v84 = vadd.f32 %v58, 0.0
    %v85 = vadd.f32 %v65, 0.0
    %v86 = vadd.f32 %v72, 0.0
    %v87 = vadd.f32 %v79, 0.0
    %v88 = vsel %vm23, %v15, inf
    %v89 = vrot.slane %v88, 4
    %v90 = vmin.f32 %v88, %v89
    %v91 = vrot.slane %v90, 2
    %v92 = vmin.f32 %v90, %v91
    %v93 = vrot.slane %v92, 1
    %v94 = vmin.f32 %v92, %v93
    %v95 = vsel %vm23, %v16, inf
    %v96 = vrot.slane %v95, 4
    %v97 = vmin.f32 %v95, %v96
    %v98 = vrot.slane %v97, 2
    %v99 = vmin.f32 %v97, %v98
    %v100 = vrot.slane %v99, 1
    %v101 = vmin.f32 %v99, %v100
    %v102 = vsel %vm23, %v17, inf
    %v103 = vrot.slane %v102, 4
    %v104 = vmin.f32 %v102, %v103
    %v105 = vrot.slane %v104, 2
    %v106 = vmin.f32 %v104, %v105
    %v107 = vrot.slane %v106, 1
    %v108 = vmin.f32 %v106, %v107
    %v109 = vsel %vm23, %v18, inf
    %v110 = vrot.slane %v109, 4
    %v111 = vmin.f32 %v109, %v110
    %v112 = vrot.slane %v111, 2
    %v113 = vmin.f32 %v111, %v112
    %v114 = vrot.slane %v113, 1
    %v115 = vmin.f32 %v113, %v114
    %v116 = vsel %vm23, %v19, inf
    %v117 = vrot.slane %v116, 4
    %v118 = vmin.f32 %v116, %v117
    %v119 = vrot.slane %v118, 2
    %v120 = vmin.f32 %v118, %v119
    %v121 = vrot.slane %v120, 1
    %v122 = vmin.f32 %v120, %v121
    %v123 = vsel %vm23, %v20, inf
    %v124 = vrot.slane %v123, 4
    %v125 = vmin.f32 %v123, %v124
    %v126 = vrot.slane %v125, 2
    %v127 = vmin.f32 %v125, %v126
    %v128 = vrot.slane %v127, 1
    %v129 = vmin.f32 %v127, %v128
    %v130 = vsel %vm23, %v21, inf
    %v131 = vrot.slane %v130, 4
    %v132 = vmin.f32 %v130, %v131
    %v133 = vrot.slane %v132, 2
    %v134 = vmin.f32 %v132, %v133
    %v135 = vrot.slane %v134, 1
    %v136 = vmin.f32 %v134, %v135
    %v137 = vsel %vm23, %v22, inf
    %v138 = vrot.slane %v137, 4
    %v139 = vmin.f32 %v137, %v138
    %v140 = vrot.slane %v139, 2
    %v141 = vmin.f32 %v139, %v140
    %v142 = vrot.slane %v141, 1
    %v143 = vmin.f32 %v141, %v142
    %v144 = vsel %vm23, %v15, -inf
    %v145 = vrot.slane %v144, 4
    %v146 = vmax.f32 %v144, %v145
    %v147 = vrot.slane %v146, 2
    %v148 = vmax.f32 %v146, %v147
    %v149 = vrot.slane %v148, 1
    %v150 = vmax.f32 %v148, %v149
    %v151 = vsel %vm23, %v16, -inf
    %v152 = vrot.slane %v151, 4
    %v153 = vmax.f32 %v151, %v152
    %v154 = vrot.slane %v153, 2
    %v155 = vmax.f32 %v153, %v154
    %v156 = vrot.slane %v155, 1
    %v157 = vmax.f32 %v155, %v156
    %v158 = vsel %vm23, %v17, -inf
    %v159 = vrot.slane %v158, 4
    %v160 = vmax.f32 %v158, %v159
    %v161 = vrot.slane %v160, 2
    %v162 = vmax.f32 %v160, %v161
    %v163 = vrot.slane %v162, 1
    %v164 = vmax.f32 %v162, %v163
    %v165 = vsel %vm23, %v18, -inf
    %v166 = vrot.slane %v165, 4
    %v167 = vmax.f32 %v165, %v166
    %v168 = vrot.slane %v167, 2
    %v169 = vmax.f32 %v167, %v168
    %v170 = vrot.slane %v169, 1
    %v171 = vmax.f32 %v169, %v170
    %v172 = vsel %vm23, %v19, -inf
    %v173 = vrot.slane %v172, 4
    %v174 = vmax.f32 %v172, %v173
    %v175 = vrot.slane %v174, 2
    %v176 = vmax.f32 %v174, %v175
    %v177 = vrot.slane %v176, 1
    %v178 = vmax.f32 %v176, %v177
    %v179 = vsel %vm23, %v20, -inf
    %v180 = vrot.slane %v179, 4
    %v181 = vmax.f32 %v179, %v180
    %v182 = vrot.slane %v181, 2
    %v183 = vmax.f32 %v181, %v182
    %v184 = vrot.slane %v183, 1
    %v185 = vmax.f32 %v183, %v184
    %v186 = vsel %vm23, %v21, -inf
    %v187 = vrot.slane %v186, 4
    %v188 = vmax.f32 %v186, %v187
    %v189 = vrot.slane %v188, 2
    %v190 = vmax.f32 %v188, %v189
    %v191 = vrot.slane %v190, 1
    %v192 = vmax.f32 %v190, %v191
    %v193 = vsel %vm23, %v22, -inf
    %v194 = vrot.slane %v193, 4
    %v195 = vmax.f32 %v193, %v194
    %v196 = vrot.slane %v195, 2
    %v197 = vmax.f32 %v195, %v196
    %v198 = vrot.slane %v197, 1
    %v199 = vmax.f32 %v197, %v198
    %v200 = vmul.f32 %v80, 0.125
    %v201 = vmul.f32 %v81, 0.125
    %v202 = vmul.f32 %v82, 0.125
    %v203 = vmul.f32 %v83, 0.125
    %v204 = vmul.f32 %v84, 0.125
    %v205 = vmul.f32 %v85, 0.125
    %v206 = vmul.f32 %v86, 0.125
    %v207 = vmul.f32 %v87, 0.125
    %v208 = vsub.f32 %v15, %v200
    %v209 = vsub.f32 %v16, %v201
    %v210 = vsub.f32 %v17, %v202
    %v211 = vsub.f32 %v18, %v203
    %v212 = vsub.f32 %v19, %v204
    %v213 = vsub.f32 %v20, %v205
    %v214 = vsub.f32 %v21, %v206
    %v215 = vsub.f32 %v22, %v207
    %v216 = vmul.f32 %v208, %v208
    %v217 = vmul.f32 %v209, %v209
    %v218 = vmul.f32 %v210, %v210
    %v219 = vmul.f32 %v211, %v211
    %v220 = vmul.f32 %v212, %v212
    %v221 = vmul.f32 %v213, %v213
    %v222 = vmul.f32 %v214, %v214
    %v223 = vmul.f32 %v215, %v215
    %v224 = vsel %vm23, %v216, 0.0
    %v225 = vrot.slane %v224, 4
    %v226 = vadd.f32 %v224, %v225
    %v227 = vrot.slane %v226, 2
    %v228 = vadd.f32 %v226, %v227
    %v229 = vrot.slane %v228, 1
    %v230 = vadd.f32 %v228, %v229
    %v231 = vsel %vm23, %v217, 0.0
    %v232 = vrot.slane %v231, 4
    %v233 = vadd.f32 %v231, %v232
    %v234 = vrot.slane %v233, 2
    %v235 = vadd.f32 %v233, %v234
    %v236 = vrot.slane %v235, 1
    %v237 = vadd.f32 %v235, %v236
    %v238 = vsel %vm23, %v218, 0.0
    %v239 = vrot.slane %v238, 4
    %v240 = vadd.f32 %v238, %v239
    %v241 = vrot.slane %v240, 2
    %v242 = vadd.f32 %v240, %v241
    %v243 = vrot.slane %v242, 1
    %v244 = vadd.f32 %v242, %v243
    %v245 = vsel %vm23, %v219, 0.0
    %v246 = vrot.slane %v245, 4
    %v247 = vadd.f32 %v245, %v246
    %v248 = vrot.slane %v247, 2
    %v249 = vadd.f32 %v247, %v248
    %v250 = vrot.slane %v249, 1
    %v251 = vadd.f32 %v249, %v250
    %v252 = vsel %vm23, %v220, 0.0
    %v253 = vrot.slane %v252, 4
    %v254 = vadd.f32 %v252, %v253
    %v255 = vrot.slane %v254, 2
    %v256 = vadd.f32 %v254, %v255
    %v257 = vrot.slane %v256, 1
    %v258 = vadd.f32 %v256, %v257
    %v259 = vsel %vm23, %v221, 0.0
    %v260 = vrot.slane %v259, 4
    %v261 = vadd.f32 %v259, %v260
    %v262 = vrot.slane %v261, 2
    %v263 = vadd.f32 %v261, %v262
    %v264 = vrot.slane %v263, 1
    %v265 = vadd.f32 %v263, %v264
    %v266 = vsel %vm23, %v222, 0.0
    %v267 = vrot.slane %v266, 4
    %v268 = vadd.f32 %v266, %v267
    %v269 = vrot.slane %v268, 2
    %v270 = vadd.f32 %v268, %v269
    %v271 = vrot.slane %v270, 1
    %v272 = vadd.f32 %v270, %v271
    %v273 = vsel %vm23, %v223, 0.0
    %v274 = vrot.slane %v273, 4
    %v275 = vadd.f32 %v273, %v274
    %v276 = vrot.slane %v275, 2
    %v277 = vadd.f32 %v275, %v276
    %v278 = vrot.slane %v277, 1
    %v279 = vadd.f32 %v277, %v278
    %v280 = vadd.f32 %v230, 0.0
    %v281 = vadd.f32 %v237, 0.0
    %v282 = vadd.f32 %v244, 0.0
    %v283 = vadd.f32 %v251, 0.0
    %v284 = vadd.f32 %v258, 0.0
    %v285 = vadd.f32 %v265, 0.0
    %v286 = vadd.f32 %v272, 0.0
    %v287 = vadd.f32 %v279, 0.0
    %v288 = vmul.f32 %v280, 0.14285715
    %v289 = vmul.f32 %v281, 0.14285715
    %v290 = vmul.f32 %v282, 0.14285715
    %v291 = vmul.f32 %v283, 0.14285715
    %v292 = vmul.f32 %v284, 0.14285715
    %v293 = vmul.f32 %v285, 0.14285715
    %v294 = vmul.f32 %v286, 0.14285715
    %v295 = vmul.f32 %v287, 0.14285715
    %v296 = vrsqrt.pop %v288
    %v297 = vmul.f32 %v296, %v288
    %v298 = vmul.f32 %v297, %v296
    %v299 = vmul.f32 0.5, %v298
    %v300 = vsub.f32 1.5, %v299
    %v301 = vmul.f32 %v296, %v300
    %v302 = vmul.f32 %v288, %v301
    %vm303 = vcmp.eq.f32.partialorder %v288, inf
    %v304 = vsel %vm303, %v288, %v302
    %vm305 = vcmp.eq.f32.partialorder %v288, 0.0
    %v306 = vand.u32 %v288, 2147483648
    %v307 = vsel %vm305, %v306, %v304
    %v308 = vrsqrt.pop %v289
    %v309 = vmul.f32 %v308, %v289
    %v310 = vmul.f32 %v309, %v308
    %v311 = vmul.f32 0.5, %v310
    %v312 = vsub.f32 1.5, %v311
    %v313 = vmul.f32 %v308, %v312
    %v314 = vmul.f32 %v289, %v313
    %vm315 = vcmp.eq.f32.partialorder %v289, inf
    %v316 = vsel %vm315, %v289, %v314
    %vm317 = vcmp.eq.f32.partialorder %v289, 0.0
    %v318 = vand.u32 %v289, 2147483648
    %v319 = vsel %vm317, %v318, %v316
    %v320 = vrsqrt.pop %v290
    %v321 = vmul.f32 %v320, %v290
    %v322 = vmul.f32 %v321, %v320
    %v323 = vmul.f32 0.5, %v322
    %v324 = vsub.f32 1.5, %v323
    %v325 = vmul.f32 %v320, %v324
    %v326 = vmul.f32 %v290, %v325
    %vm327 = vcmp.eq.f32.partialorder %v290, inf
    %v328 = vsel %vm327, %v290, %v326
    %vm329 = vcmp.eq.f32.partialorder %v290, 0.0
    %v330 = vand.u32 %v290, 2147483648
    %v331 = vsel %vm329, %v330, %v328
    %v332 = vrsqrt.pop %v291
    %v333 = vmul.f32 %v332, %v291
    %v334 = vmul.f32 %v333, %v332
    %v335 = vmul.f32 0.5, %v334
    %v336 = vsub.f32 1.5, %v335
    %v337 = vmul.f32 %v332, %v336
    %v338 = vmul.f32 %v291, %v337
    %vm339 = vcmp.eq.f32.partialorder %v291, inf
    %v340 = vsel %vm339, %v291, %v338
    %vm341 = vcmp.eq.f32.partialorder %v291, 0.0
    %v342 = vand.u32 %v291, 2147483648
    %v343 = vsel %vm341, %v342, %v340
    %v344 = vrsqrt.pop %v292
    %v345 = vmul.f32 %v344, %v292
    %v346 = vmul.f32 %v345, %v344
    %v347 = vmul.f32 0.5, %v346
    %v348 = vsub.f32 1.5, %v347
    %v349 = vmul.f32 %v344, %v348
    %v350 = vmul.f32 %v292, %v349
    %vm351 = vcmp.eq.f32.partialorder %v292, inf
    %v352 = vsel %vm351, %v292, %v350
    %vm353 = vcmp.eq.f32.partialorder %v292, 0.0
    %v354 = vand.u32 %v292, 2147483648
    %v355 = vsel %vm353, %v354, %v352
    %v356 = vrsqrt.pop %v293
    %v357 = vmul.f32 %v356, %v293
    %v358 = vmul.f32 %v357, %v356
    %v359 = vmul.f32 0.5, %v358
    %v360 = vsub.f32 1.5, %v359
    %v361 = vmul.f32 %v356, %v360
    %v362 = vmul.f32 %v293, %v361
    %vm363 = vcmp.eq.f32.partialorder %v293, inf
    %v364 = vsel %vm363, %v293, %v362
    %vm365 = vcmp.eq.f32.partialorder %v293, 0.0
    %v366 = vand.u32 %v293, 2147483648
    %v367 = vsel %vm365, %v366, %v364
    %v368 = vrsqrt.pop %v294
    %v369 = vmul.f32 %v368, %v294
    %v370 = vmul.f32 %v369, %v368
    %v371 = vmul.f32 0.5, %v370
    %v372 = vsub.f32 1.5, %v371
    %v373 = vmul.f32 %v368, %v372
    %v374 = vmul.f32 %v294, %v373
    %vm375 = vcmp.eq.f32.partialorder %v294, inf
    %v376 = vsel %vm375, %v294, %v374
    %vm377 = vcmp.eq.f32.partialorder %v294, 0.0
    %v378 = vand.u32 %v294, 2147483648
    %v379 = vsel %vm377, %v378, %v376
    %v380 = vrsqrt.pop %v295
    %v381 = vmul.f32 %v380, %v295
    %v382 = vmul.f32 %v381, %v380
    %v383 = vmul.f32 0.5, %v382
    %v384 = vsub.f32 1.5, %v383
    %v385 = vmul.f32 %v380, %v384
    %v386 = vmul.f32 %v295, %v385
    %vm387 = vcmp.eq.f32.partialorder %v295, inf
    %v388 = vsel %vm387, %v295, %v386
    %vm389 = vcmp.eq.f32.partialorder %v295, 0.0
    %v390 = vand.u32 %v295, 2147483648
    %v391 = vsel %vm389, %v390, %v388
    %vm400 = vcmask 1041409
    %v401 = vsel %vm400, %v201, %v200
    %vm402 = vcmask 1042434
    %v403 = vsel %vm402, %v202, %v401
    %vm404 = vcmask 1043459
    %v405 = vsel %vm404, %v203, %v403
    %vm406 = vcmask 1044484
    %v407 = vsel %vm406, %v204, %v405
    %vm408 = vcmask 1045509
    %v409 = vsel %vm408, %v205, %v407
    %vm410 = vcmask 1046534
    %v411 = vsel %vm410, %v206, %v409
    %vm412 = vcmask 1047559
    %v413 = vsel %vm412, %v207, %v411
    %v423 = vsel %vm400, %v101, %v94
    %v424 = vsel %vm402, %v108, %v423
    %v425 = vsel %vm404, %v115, %v424
    %v426 = vsel %vm406, %v122, %v425
    %v427 = vsel %vm408, %v129, %v426
    %v428 = vsel %vm410, %v136, %v427
    %v429 = vsel %vm412, %v143, %v428
    %430 = vrot.lane.b32.xlu0 %v429, 32
    %v431 = vpop.permute.xlu0 %430
    %v441 = vsel %vm400, %v157, %v150
    %v442 = vsel %vm402, %v164, %v441
    %v443 = vsel %vm404, %v171, %v442
    %v444 = vsel %vm406, %v178, %v443
    %v445 = vsel %vm408, %v185, %v444
    %v446 = vsel %vm410, %v192, %v445
    %v447 = vsel %vm412, %v199, %v446
    %448 = vrot.lane.b32.xlu0 %v447, 64
    %v449 = vpop.permute.xlu0 %448
    %v459 = vsel %vm400, %v319, %v307
    %v460 = vsel %vm402, %v331, %v459
    %v461 = vsel %vm404, %v343, %v460
    %v462 = vsel %vm406, %v355, %v461
    %v463 = vsel %vm408, %v367, %v462
    %v464 = vsel %vm410, %v379, %v463
    %v465 = vsel %vm412, %v391, %v464
    %466 = vrot.lane.b32.xlu0 %v465, 96
    %v467 = vpop.permute.xlu0 %466
    %v469 = vsel %vm23, %v413, %v431
    %vm470 = vcmask 523264
    %v471 = vsel %vm470, %v469, %v449
    %vm472 = vcmask 785408
    %v473 = vsel %vm472, %v471, %v467
    %v474 = vld [vmem:[%s1] sm:$0xff]
    %v475 = vld [vmem:[%s1 + $0x8] sm:$0xff]
    %v476 = vld [vmem:[%s1 + $0x10] sm:$0xff]
    %v477 = vld [vmem:[%s1 + $0x18] sm:$0xff]
    %v478 = vld [vmem:[%s1 + $0x20] sm:$0xff]
    %v479 = vld [vmem:[%s1 + $0x28] sm:$0xff]
    %v480 = vld [vmem:[%s1 + $0x30] sm:$0xff]
    %v481 = vld [vmem:[%s1 + $0x38] sm:$0xff]
    %v482 = vld [vmem:[%s1 + $0x40] sm:$0xff]
    %v483 = vld [vmem:[%s1 + $0x48] sm:$0xff]
    %v484 = vld [vmem:[%s1 + $0x50] sm:$0xff]
    %v485 = vld [vmem:[%s1 + $0x58] sm:$0xff]
    %v486 = vld [vmem:[%s1 + $0x60] sm:$0xff]
    %v487 = vld [vmem:[%s1 + $0x68] sm:$0xff]
    %v488 = vld [vmem:[%s1 + $0x70] sm:$0xff]
    %v489 = vld [vmem:[%s1 + $0x78] sm:$0xff]
    %v490 = vld [vmem:[%s2] sm:$0x1]
    %v492 = vperm.slane %v490, 0
    %494 = vmatpush.msra.mxu0 %v489
    %495 = vmatpush.msra.mxu0 %v488
    %496 = vmatpush.msra.mxu0 %v487
    %497 = vmatpush.msra.mxu0 %v486
    %498 = vmatpush.msra.mxu0 %v485
    %499 = vmatpush.msra.mxu0 %v484
    %500 = vmatpush.msra.mxu0 %v483
    %501 = vmatpush.msra.mxu0 %v482
    %502 = vmatpush.msra.mxu0 %v481
    %503 = vmatpush.msra.mxu0 %v480
    %504 = vmatpush.msra.mxu0 %v479
    %505 = vmatpush.msra.mxu0 %v478
    %506 = vmatpush.msra.mxu0 %v477
    %507 = vmatpush.msra.mxu0 %v476
    %508 = vmatpush.msra.mxu0 %v475
    %509 = vmatpush.msra.mxu0 %v474
    %510 = vmatmul.f32.gmra.mxu0 %v473
    %v511 = vpop.f32.mrf.mxu0
    %v512 = vadd.f32 %v492, %v511
    %513 = vdwg.mxu0
    %514 = vst [vmem:[#allocation2] sm:$0xff] %v512
    // Predicated region
    $region14: #{xtoy_forward.1} parent=1 // pred_check
      _
    $region15: #{xtoy_forward.1} parent=1 // pred_check_branch
      %516 = sbr.rel (0) target = $region17
    $region16: #{xtoy_forward.1} parent=1 // pred_region
      %518 = vsyncadd [#allocation3], 96
      %s519 = sshll.u32 [#allocation2], 4
      %s520 = int_to_ptr.vmem [resolvable:$true] %s519
      %s521 = sshll.u32 %s3, 4
      %s522 = int_to_ptr.hbm [resolvable:$true] %s521
      %527 = dma.vmem_to_hbm [thread:$0]  %s520, 32, %s522, [#allocation3], 32, 32, 2
    $region17: #{xtoy_forward.1} parent=1 // pred_fallthru
      _
    // Predicated region
    $region18: #{xtoy_forward.1} parent=1 // pred_check
      _
    $region19: #{xtoy_forward.1} parent=1 // pred_check_branch
      %529 = sbr.rel (0) target = $region21
    $region20: #{xtoy_forward.1} parent=1 // pred_region
      %531 = dma.done [#allocation3], 128
    $region21: #{xtoy_forward.1} parent=1 // pred_fallthru
      _
    %532 = vsyncpa [#allocation3], 1

</llo_original>
